<compile_context>
chip_gen: v7x
topology: tpu7x:2x2x1
jax: 0.10.0
libtpu: 0.0.40
codegen_flags: <defaults>
</compile_context>

<pallas_src>
import jax
import jax.numpy as jnp
from jax.experimental import pallas as pl
from jax.experimental.pallas import tpu as pltpu


LANE = 128        # lane width of a vreg (last dim)
SUBLANE = 8       # sublane count of a vreg (second-to-last dim)
_NEG_BIG = -1e30  # finite "-inf" for masking padded logit columns
_VMEM_BUDGET_BYTES = 24 * 2**20  # conservative per-core budget for tile sizing


def _round_up(n, m):
    return ((n + m - 1) // m) * m


# ----------------------------------------------------------------------------
# One-time parameter preprocessing (hoisted out of the per-call path).
# ----------------------------------------------------------------------------
def prepare_params(params):
    """Pad each layer to (8,128)-aligned tiles; weights -> bf16, biases -> f32.

    Padded rows/cols are zero, so padded lanes contribute nothing downstream.
    Returns a tuple of (w_p[bf16 (K_p,N_p)], b_p[f32 (1,N_p)]) per layer.
    """
    prepared = []
    prev_p = _round_up(params[0][0].shape[0], LANE)
    for (w, b) in params:
        fan_in, fan_out = w.shape
        out_p = _round_up(fan_out, LANE)
        w_p = jnp.zeros((prev_p, out_p), jnp.bfloat16)
        w_p = w_p.at[:fan_in, :fan_out].set(w.astype(jnp.bfloat16))
        b_p = jnp.zeros((1, out_p), jnp.float32)
        b_p = b_p.at[:, :fan_out].set(b.astype(jnp.float32))
        prepared.append((w_p, b_p))
        prev_p = out_p
    return tuple(prepared)


# ----------------------------------------------------------------------------
# Fused kernel: all layers per batch tile, activations kept in vregs/VMEM.
# ----------------------------------------------------------------------------
def _make_fused_mlp_kernel(num_layers, out_valid):
    """num_layers = hidden layers + output layer; out_valid = true #classes."""

    def kernel(x_ref, *refs):
        o_ref = refs[-1]
        wb = refs[:-1]  # (w0, b0, w1, b1, ..., wL, bL); weights bf16, biases f32

        h = x_ref[...]                          # bf16 (tm, in_p)
        for li in range(num_layers):            # unrolled at trace time
            w = wb[2 * li][...]                 # bf16 (K_p, N_p)
            b = wb[2 * li + 1][...]             # f32  (1, N_p)
            y = jnp.dot(h, w, preferred_element_type=jnp.float32) + b
            if li < num_layers - 1:
                # hidden layer: ReLU; dropout in eval mode is identity.
                h = jnp.maximum(y, 0.0).astype(jnp.bfloat16)
            else:
                # output layer: mask padded logit columns, then log_softmax.
                col = jax.lax.broadcasted_iota(jnp.int32, y.shape, 1)
                y = jnp.where(col < out_valid, y, _NEG_BIG)
                m = jnp.max(y, axis=1, keepdims=True)
                z = y - m
                lse = jnp.log(jnp.sum(jnp.exp(z), axis=1, keepdims=True))
                o_ref[...] = z - lse

    return kernel


# ----------------------------------------------------------------------------
# Wrapper: batch grid, resident weights, lane-dense output, slice back.
# ----------------------------------------------------------------------------
def fused_mlp_forward(x, prepared_params, *, output_size):
    """x: (batch, in_features); prepared_params from prepare_params()."""
    batch, in_features = x.shape
    in_p = prepared_params[0][0].shape[0]
    out_p = prepared_params[-1][0].shape[1]
    layer_out_ps = [w.shape[1] for (w, _) in prepared_params]
    num_layers = len(prepared_params)

    # ---- tile-size selection (largest tm fitting the VMEM budget) ----------
    weight_bytes = sum(w.size * 2 + b.size * 4 for (w, b) in prepared_params)

    def _fits(tm):
        x_buf = 2 * tm * in_p * 2          # double-buffered bf16 input block
        o_buf = 2 * tm * out_p * 4         # double-buffered f32 output block
        act = tm * max(layer_out_ps) * 4   # largest live f32 activation
        return weight_bytes + x_buf + o_buf + act <= _VMEM_BUDGET_BYTES

    tm = SUBLANE
    for cand in (1024, 512, 256, 128, 64, 32, 16, 8):
        if _fits(cand):
            tm = cand
            break
    tm = min(tm, _round_up(max(batch, 1), SUBLANE))
    batch_p = _round_up(max(batch, 1), tm)
    grid = (batch_p // tm,)

    # ---- pad + cast input (bf16 halves the x DMA / vreg footprint) ---------
    x_p = jnp.zeros((batch_p, in_p), jnp.bfloat16)
    x_p = x_p.at[:batch, :in_features].set(x.astype(jnp.bfloat16))

    flat_wb = [a for wb in prepared_params for a in wb]

    # x / out are tiled over the batch grid; weights & biases use constant
    # index maps -> DMA'd once and kept resident in VMEM.
    in_specs = [pl.BlockSpec((tm, in_p), lambda i: (i, 0))] + [
        pl.BlockSpec(a.shape, lambda i: (0, 0)) for a in flat_wb
    ]
    out_specs = pl.BlockSpec((tm, out_p), lambda i: (i, 0))

    # ---- scheduler hint + VMEM limit ---------------------------------------
    flops = 2 * batch_p * sum(w.shape[0] * w.shape[1] for (w, _) in prepared_params)
    bytes_accessed = weight_bytes + x_p.size * 2 + batch_p * out_p * 4
    cost = pl.CostEstimate(
        flops=flops,
        transcendentals=batch_p * out_p,   # exp in the final log_softmax
        bytes_accessed=bytes_accessed,
    )
    vmem_need = (weight_bytes + 2 * tm * in_p * 2 + 2 * tm * out_p * 4
                 + tm * max(layer_out_ps) * 4)
    vmem_limit = int(min(max(2 * vmem_need, 16 * 2**20), 64 * 2**20))

    kernel = _make_fused_mlp_kernel(num_layers=num_layers, out_valid=output_size)

    out_padded = pl.pallas_call(
        kernel,
        out_shape=jax.ShapeDtypeStruct((batch_p, out_p), jnp.float32),
        grid=grid,
        in_specs=in_specs,
        out_specs=out_specs,
        compiler_params=pltpu.CompilerParams(
            dimension_semantics=("parallel",),   # shard batch tiles across TCs
            vmem_limit_bytes=vmem_limit,
        ),
        cost_estimate=cost,
    )(x_p, *flat_wb)

    # TODO(synk): downstream consumers could take the padded lane-dense slab
    # directly and skip this slice (saves one XLA copy per call).
    return out_padded[:batch, :output_size]


network_forward = jax.jit(fused_mlp_forward, static_argnames=("output_size",))


# ----------------------------------------------------------------------------
# Param init mimicking torch.nn.Linear default (uniform ±1/sqrt(fan_in)).
# ----------------------------------------------------------------------------
def init_network_params(key, input_size, output_size, hidden_layers):
    params = []
    sizes = [input_size] + list(hidden_layers) + [output_size]
    for fan_in, fan_out in zip(sizes[:-1], sizes[1:]):
        key, wk, bk = jax.random.split(key, 3)
        bound = 1.0 / (fan_in ** 0.5)
        w = jax.random.uniform(wk, (fan_in, fan_out), jnp.float32, -bound, bound)
        b = jax.random.uniform(bk, (1, fan_out), jnp.float32, -bound, bound)
        params.append((w, b))
    return tuple(params)


def _reference_forward(x, params):
    """Pure-JAX f32 reference (eval-mode dropout = identity)."""
    h = x
    for (w, b) in params[:-1]:
        h = jnp.maximum(h @ w + b, 0.0)
    w_out, b_out = params[-1]
    logits = h @ w_out + b_out
    return jax.nn.log_softmax(logits, axis=1)


# ----------------------------------------------------------------------------
if __name__ == "__main__":
    key = jax.random.PRNGKey(0)

    batch = 2
    input_size = 32
    hidden_layers = [64, 32]
    output_size = 10

    key, pkey, xkey = jax.random.split(key, 3)
    params = init_network_params(pkey, input_size, output_size, hidden_layers)
    x = jax.random.normal(xkey, (batch, input_size), jnp.float32)

    # One-time weight preprocessing (padding + bf16 cast), then run the kernel.
    prepped = jax.block_until_ready(prepare_params(params))
    out = network_forward(x, prepped, output_size=output_size)
    out = jax.block_until_ready(out)

    # sanity: shape, normalization, and agreement with the f32 reference
    # (bf16 MXU operands / activations -> loose tolerance).
    assert out.shape == (batch, output_size)
    probs_sum = jnp.sum(jnp.exp(out), axis=1)
    assert bool(jnp.all(jnp.abs(probs_sum - 1.0) < 1e-4))
    ref = _reference_forward(x, params)
    assert bool(jnp.all(jnp.abs(out - ref) < 0.1))

    print("KERNEL_OK")
</pallas_src>

<mosaic_0001>
module attributes {stable_mosaic.version = 11 : i64} {
  func.func @kernel(%arg0: i32, %arg1: memref<8x128xbf16, #tpu.memory_space<vmem>>, %arg2: memref<128x128xbf16, #tpu.memory_space<vmem>>, %arg3: memref<1x128xf32, #tpu.memory_space<vmem>>, %arg4: memref<128x128xbf16, #tpu.memory_space<vmem>>, %arg5: memref<1x128xf32, #tpu.memory_space<vmem>>, %arg6: memref<128x128xbf16, #tpu.memory_space<vmem>>, %arg7: memref<1x128xf32, #tpu.memory_space<vmem>>, %arg8: memref<8x128xf32, #tpu.memory_space<vmem>>) attributes {dimension_semantics = [#tpu.dimension_semantics<parallel>], iteration_bounds = array<i64: 1>, scalar_prefetch = 0 : i64, scratch_operands = 0 : i64, tpu.core_type = #tpu.core_type<tc>, window_params = [{transform_indices = @transform_0, window_bounds = array<i64: 8, 128>}, {pipeline_mode = #tpu.pipeline_mode<synchronous>, transform_indices = @transform_1, window_bounds = array<i64: 128, 128>}, {pipeline_mode = #tpu.pipeline_mode<synchronous>, transform_indices = @transform_2, window_bounds = array<i64: 1, 128>}, {pipeline_mode = #tpu.pipeline_mode<synchronous>, transform_indices = @transform_3, window_bounds = array<i64: 128, 128>}, {pipeline_mode = #tpu.pipeline_mode<synchronous>, transform_indices = @transform_4, window_bounds = array<i64: 1, 128>}, {pipeline_mode = #tpu.pipeline_mode<synchronous>, transform_indices = @transform_5, window_bounds = array<i64: 128, 128>}, {pipeline_mode = #tpu.pipeline_mode<synchronous>, transform_indices = @transform_6, window_bounds = array<i64: 1, 128>}, {transform_indices = @transform_7, window_bounds = array<i64: 8, 128>}]} {
    %c0 = arith.constant 0 : index
    %c0_0 = arith.constant 0 : index
    %0 = vector.load %arg1[%c0, %c0_0] : memref<8x128xbf16, #tpu.memory_space<vmem>>, vector<8x128xbf16>
    %c0_1 = arith.constant 0 : index
    %c0_2 = arith.constant 0 : index
    %1 = vector.load %arg2[%c0_1, %c0_2] : memref<128x128xbf16, #tpu.memory_space<vmem>>, vector<128x128xbf16>
    %c0_3 = arith.constant 0 : index
    %c0_4 = arith.constant 0 : index
    %2 = vector.load %arg3[%c0_3, %c0_4] : memref<1x128xf32, #tpu.memory_space<vmem>>, vector<1x128xf32>
    %cst = arith.constant dense<0.000000e+00> : vector<8x128xf32>
    %3 = tpu.matmul %0, %1, %cst {dimension_numbers = #tpu.dot_dimension_numbers<[1], [0], [0], [1], [0, 0, 1, 1], [], []>} : vector<8x128xbf16>, vector<128x128xbf16>, vector<8x128xf32> -> vector<8x128xf32>
    %4 = vector.broadcast %2 : vector<1x128xf32> to vector<8x128xf32>
    %5 = arith.addf %3, %4 : vector<8x128xf32>
    %cst_5 = arith.constant 0.000000e+00 : f32
    %6 = vector.broadcast %cst_5 : f32 to vector<8x128xf32>
    %7 = arith.maximumf %5, %6 : vector<8x128xf32>
    %8 = arith.truncf %7 : vector<8x128xf32> to vector<8x128xbf16>
    %c0_6 = arith.constant 0 : index
    %c0_7 = arith.constant 0 : index
    %9 = vector.load %arg4[%c0_6, %c0_7] : memref<128x128xbf16, #tpu.memory_space<vmem>>, vector<128x128xbf16>
    %c0_8 = arith.constant 0 : index
    %c0_9 = arith.constant 0 : index
    %10 = vector.load %arg5[%c0_8, %c0_9] : memref<1x128xf32, #tpu.memory_space<vmem>>, vector<1x128xf32>
    %cst_10 = arith.constant dense<0.000000e+00> : vector<8x128xf32>
    %11 = tpu.matmul %8, %9, %cst_10 {dimension_numbers = #tpu.dot_dimension_numbers<[1], [0], [0], [1], [0, 0, 1, 1], [], []>} : vector<8x128xbf16>, vector<128x128xbf16>, vector<8x128xf32> -> vector<8x128xf32>
    %12 = vector.broadcast %10 : vector<1x128xf32> to vector<8x128xf32>
    %13 = arith.addf %11, %12 : vector<8x128xf32>
    %cst_11 = arith.constant 0.000000e+00 : f32
    %14 = vector.broadcast %cst_11 : f32 to vector<8x128xf32>
    %15 = arith.maximumf %13, %14 : vector<8x128xf32>
    %16 = arith.truncf %15 : vector<8x128xf32> to vector<8x128xbf16>
    %c0_12 = arith.constant 0 : index
    %c0_13 = arith.constant 0 : index
    %17 = vector.load %arg6[%c0_12, %c0_13] : memref<128x128xbf16, #tpu.memory_space<vmem>>, vector<128x128xbf16>
    %c0_14 = arith.constant 0 : index
    %c0_15 = arith.constant 0 : index
    %18 = vector.load %arg7[%c0_14, %c0_15] : memref<1x128xf32, #tpu.memory_space<vmem>>, vector<1x128xf32>
    %cst_16 = arith.constant dense<0.000000e+00> : vector<8x128xf32>
    %19 = tpu.matmul %16, %17, %cst_16 {dimension_numbers = #tpu.dot_dimension_numbers<[1], [0], [0], [1], [0, 0, 1, 1], [], []>} : vector<8x128xbf16>, vector<128x128xbf16>, vector<8x128xf32> -> vector<8x128xf32>
    %20 = vector.broadcast %18 : vector<1x128xf32> to vector<8x128xf32>
    %21 = arith.addf %19, %20 : vector<8x128xf32>
    %22 = tpu.iota {dimensions = array<i32: 1>} : vector<8x128xi32>
    %c10_i32 = arith.constant 10 : i32
    %23 = vector.broadcast %c10_i32 : i32 to vector<8x128xi32>
    %24 = arith.cmpi slt, %22, %23 : vector<8x128xi32>
    %cst_17 = arith.constant -1.000000e+30 : f32
    %25 = vector.broadcast %cst_17 : f32 to vector<8x128xf32>
    %26 = arith.select %24, %21, %25 : vector<8x128xi1>, vector<8x128xf32>
    %cst_18 = arith.constant dense<0xFF800000> : vector<8xf32>
    %27 = vector.multi_reduction <maximumf>, %26, %cst_18 [1] : vector<8x128xf32> to vector<8xf32>
    %28 = vector.shape_cast %27 : vector<8xf32> to vector<8x1xf32>
    %29 = vector.broadcast %28 : vector<8x1xf32> to vector<8x128xf32>
    %30 = arith.subf %26, %29 : vector<8x128xf32>
    %31 = math.exp %30 : vector<8x128xf32>
    %cst_19 = arith.constant dense<0.000000e+00> : vector<8xf32>
    %32 = vector.multi_reduction <add>, %31, %cst_19 [1] : vector<8x128xf32> to vector<8xf32>
    %33 = vector.shape_cast %32 : vector<8xf32> to vector<8x1xf32>
    %34 = math.log %33 : vector<8x1xf32>
    %35 = vector.broadcast %34 : vector<8x1xf32> to vector<8x128xf32>
    %36 = arith.subf %30, %35 : vector<8x128xf32>
    %c0_20 = arith.constant 0 : index
    %c0_21 = arith.constant 0 : index
    %37 = vector.load %arg8[%c0_20, %c0_21] : memref<8x128xf32, #tpu.memory_space<vmem>>, vector<8x128xf32>
    tpu.vector_store %arg8[%c0_20, %c0_21], %36 {strides = array<i32>} : memref<8x128xf32, #tpu.memory_space<vmem>>, vector<8x128xf32>,
    return
  }
  func.func @transform_0(%arg0: i32) -> (i32, i32) {
    %c0_i32 = arith.constant 0 : i32
    %c0_i32_0 = arith.constant 0 : i32
    return %arg0, %c0_i32 : i32, i32
  }
  func.func @transform_1(%arg0: i32) -> (i32, i32) {
    %c0_i32 = arith.constant 0 : i32
    %c0_i32_0 = arith.constant 0 : i32
    %c0_i32_1 = arith.constant 0 : i32
    return %c0_i32, %c0_i32_0 : i32, i32
  }
  func.func @transform_2(%arg0: i32) -> (i32, i32) {
    %c0_i32 = arith.constant 0 : i32
    %c0_i32_0 = arith.constant 0 : i32
    %c0_i32_1 = arith.constant 0 : i32
    return %c0_i32, %c0_i32_0 : i32, i32
  }
  func.func @transform_3(%arg0: i32) -> (i32, i32) {
    %c0_i32 = arith.constant 0 : i32
    %c0_i32_0 = arith.constant 0 : i32
    %c0_i32_1 = arith.constant 0 : i32
    return %c0_i32, %c0_i32_0 : i32, i32
  }
  func.func @transform_4(%arg0: i32) -> (i32, i32) {
    %c0_i32 = arith.constant 0 : i32
    %c0_i32_0 = arith.constant 0 : i32
    %c0_i32_1 = arith.constant 0 : i32
    return %c0_i32, %c0_i32_0 : i32, i32
  }
  func.func @transform_5(%arg0: i32) -> (i32, i32) {
    %c0_i32 = arith.constant 0 : i32
    %c0_i32_0 = arith.constant 0 : i32
    %c0_i32_1 = arith.constant 0 : i32
    return %c0_i32, %c0_i32_0 : i32, i32
  }
  func.func @transform_6(%arg0: i32) -> (i32, i32) {
    %c0_i32 = arith.constant 0 : i32
    %c0_i32_0 = arith.constant 0 : i32
    %c0_i32_1 = arith.constant 0 : i32
    return %c0_i32, %c0_i32_0 : i32, i32
  }
  func.func @transform_7(%arg0: i32) -> (i32, i32) {
    %c0_i32 = arith.constant 0 : i32
    %c0_i32_0 = arith.constant 0 : i32
    return %arg0, %c0_i32 : i32, i32
  }
}

</mosaic_0001>

<llo_original>
// kernel: fused_mlp_forward.1
$region0: #{fused_mlp_forward.1}
  #allocation0 [shape = 'u32[]', space=smem, size = 0x4, offset = 0x4, fixed_abs, tag = 'smem constant byte address 0x4 - core index']
  #allocation1 [shape = 'u32[144,128]{1,0:T(1,128)}', space=vmem, size = 0x12000, scoped, tag = 'internal scratch']
  %s0 = inlined_call_operand.vmem [shape: bf16[8,128], index: 0, kind: input, shape index: {}]
  %s1 = inlined_call_operand.hbm [shape: bf16[128,128], index: 1, kind: input, shape index: {}]
  %s2 = inlined_call_operand.vmem [shape: f32[1,128], index: 2, kind: input, shape index: {}]
  %s3 = inlined_call_operand.hbm [shape: bf16[128,128], index: 3, kind: input, shape index: {}]
  %s4 = inlined_call_operand.vmem [shape: f32[1,128], index: 4, kind: input, shape index: {}]
  %s5 = inlined_call_operand.hbm [shape: bf16[128,128], index: 5, kind: input, shape index: {}]
  %s6 = inlined_call_operand.vmem [shape: f32[1,128], index: 6, kind: input, shape index: {}]
  %s7 = inlined_call_operand.vmem [shape: f32[8,128], index: 7, kind: output, shape index: {}]
  %s8 = sld [smem:[#allocation0]]
  $region50: #{fused_mlp_forward.1} parent=0
    _
  %s10 = ssub.s32 1, %s8
  %s11 = scalar_select 0, %s10, %s8
  $region1: #{fused_mlp_forward.1} parent=0
    #allocation2 [shape = 'u8[32768]{0}', space=vmem, size = 0x8000, scoped, tag = 'input window, operand 1, single buffered']
    #allocation3 [shape = 's32[1]{0}', space=sflag, size = 0x4, scoped, tag = 'scoped memory for fused_mlp_forward.1']
    #allocation4 [shape = 'u8[32768]{0}', space=vmem, size = 0x8000, scoped, tag = 'input window, operand 3, single buffered']
    #allocation5 [shape = 's32[1]{0}', space=sflag, size = 0x4, scoped, tag = 'scoped memory for fused_mlp_forward.1']
    #allocation6 [shape = 'u8[32768]{0}', space=vmem, size = 0x8000, scoped, tag = 'input window, operand 5, single buffered']
    %12 = vsyncpa [#allocation3], 0
    %13 = vsyncpa [#allocation5], 0
    // Predicated region
    $region2: #{fused_mlp_forward.1} parent=1 // pred_check
      _
    $region3: #{fused_mlp_forward.1} parent=1 // pred_check_branch
      %15 = sbr.rel (0) target = $region5
    $region4: #{fused_mlp_forward.1} parent=1 // pred_region
      _
    $region5: #{fused_mlp_forward.1} parent=1 // pred_fallthru
      _
    // Predicated region
    $region6: #{fused_mlp_forward.1} parent=1 // pred_check
      _
    $region7: #{fused_mlp_forward.1} parent=1 // pred_check_branch
      %17 = sbr.rel (0) target = $region9
    $region8: #{fused_mlp_forward.1} parent=1 // pred_region
      %s19 = ssub.s32 1024, 1024
      %20 = vsyncadd [#allocation3], %s19
      %s21 = sshll.u32 [#allocation2], 4
      %s22 = int_to_ptr.vmem [resolvable:$true] %s21
      %27 = dma.hbm_to_vmem [thread:$0]  %s1, 1024, %s22, [#allocation3], 64, 64, 4
    $region9: #{fused_mlp_forward.1} parent=1 // pred_fallthru
      _
    // Predicated region
    $region10: #{fused_mlp_forward.1} parent=1 // pred_check
      _
    $region11: #{fused_mlp_forward.1} parent=1 // pred_check_branch
      %29 = sbr.rel (0) target = $region13
    $region12: #{fused_mlp_forward.1} parent=1 // pred_region
      _
    $region13: #{fused_mlp_forward.1} parent=1 // pred_fallthru
      _
    // Predicated region
    $region14: #{fused_mlp_forward.1} parent=1 // pred_check
      _
    $region15: #{fused_mlp_forward.1} parent=1 // pred_check_branch
      %31 = sbr.rel (0) target = $region17
    $region16: #{fused_mlp_forward.1} parent=1 // pred_region
      %s33 = ssub.s32 1024, 1024
      %34 = vsyncadd [#allocation5], %s33
      %s35 = sshll.u32 [#allocation4], 4
      %s36 = int_to_ptr.vmem [resolvable:$true] %s35
      %41 = dma.hbm_to_vmem [thread:$0]  %s3, 1024, %s36, [#allocation5], 64, 64, 4
    $region17: #{fused_mlp_forward.1} parent=1 // pred_fallthru
      _
    // Predicated region
    $region18: #{fused_mlp_forward.1} parent=1 // pred_check
      _
    $region19: #{fused_mlp_forward.1} parent=1 // pred_check_branch
      %43 = sbr.rel (0) target = $region21
    $region20: #{fused_mlp_forward.1} parent=1 // pred_region
      _
    $region21: #{fused_mlp_forward.1} parent=1 // pred_fallthru
      _
    // Predicated region
    $region22: #{fused_mlp_forward.1} parent=1 // pred_check
      _
    $region23: #{fused_mlp_forward.1} parent=1 // pred_check_branch
      %45 = sbr.rel (0) target = $region25
    $region24: #{fused_mlp_forward.1} parent=1 // pred_region
      %s47 = ssub.s32 1024, 1024
      %48 = vsyncadd [#allocation5], %s47
      %s49 = sshll.u32 [#allocation6], 4
      %s50 = int_to_ptr.vmem [resolvable:$true] %s49
      %55 = dma.hbm_to_vmem [thread:$0]  %s5, 1024, %s50, [#allocation5], 64, 64, 4
    $region25: #{fused_mlp_forward.1} parent=1 // pred_fallthru
      _
    // Predicated region
    $region26: #{fused_mlp_forward.1} parent=1 // pred_check
      _
    $region27: #{fused_mlp_forward.1} parent=1 // pred_check_branch
      %57 = sbr.rel (0) target = $region29
    $region28: #{fused_mlp_forward.1} parent=1 // pred_region
      _
    $region29: #{fused_mlp_forward.1} parent=1 // pred_fallthru
      _
    // Predicated region
    $region30: #{fused_mlp_forward.1} parent=1 // pred_check
      _
    $region31: #{fused_mlp_forward.1} parent=1 // pred_check_branch
      %59 = sbr.rel (0) target = $region33
    $region32: #{fused_mlp_forward.1} parent=1 // pred_region
      %60 = dma.done [#allocation3], 1024
    $region33: #{fused_mlp_forward.1} parent=1 // pred_fallthru
      _
    // Predicated region
    $region34: #{fused_mlp_forward.1} parent=1 // pred_check
      _
    $region35: #{fused_mlp_forward.1} parent=1 // pred_check_branch
      %62 = sbr.rel (0) target = $region37
    $region36: #{fused_mlp_forward.1} parent=1 // pred_region
      %63 = dma.done [#allocation5], 1024
    $region37: #{fused_mlp_forward.1} parent=1 // pred_fallthru
      _
    // Predicated region
    $region38: #{fused_mlp_forward.1} parent=1 // pred_check
      _
    $region39: #{fused_mlp_forward.1} parent=1 // pred_check_branch
      %65 = sbr.rel (0) target = $region41
    $region40: #{fused_mlp_forward.1} parent=1 // pred_region
      %66 = dma.done [#allocation5], 1024
    $region41: #{fused_mlp_forward.1} parent=1 // pred_fallthru
      _
    %v68 = vld [vmem:[%s0] sm:$0xf]
    %v69 = vld [vmem:[#allocation2] sm:$0xf]
    %v70 = vld [vmem:[#allocation2 + $0x4] sm:$0xf]
    %v71 = vld [vmem:[#allocation2 + $0x8] sm:$0xf]
    %v72 = vld [vmem:[#allocation2 + $0xc] sm:$0xf]
    %v73 = vld [vmem:[#allocation2 + $0x10] sm:$0xf]
    %v74 = vld [vmem:[#allocation2 + $0x14] sm:$0xf]
    %v75 = vld [vmem:[#allocation2 + $0x18] sm:$0xf]
    %v76 = vld [vmem:[#allocation2 + $0x1c] sm:$0xf]
    %v77 = vld [vmem:[#allocation2 + $0x20] sm:$0xf]
    %v78 = vld [vmem:[#allocation2 + $0x24] sm:$0xf]
    %v79 = vld [vmem:[#allocation2 + $0x28] sm:$0xf]
    %v80 = vld [vmem:[#allocation2 + $0x2c] sm:$0xf]
    %v81 = vld [vmem:[#allocation2 + $0x30] sm:$0xf]
    %v82 = vld [vmem:[#allocation2 + $0x34] sm:$0xf]
    %v83 = vld [vmem:[#allocation2 + $0x38] sm:$0xf]
    %v84 = vld [vmem:[#allocation2 + $0x3c] sm:$0xf]
    %v85 = vld [vmem:[%s2] sm:$0x1]
    %v87 = vlaneseq
    %v88 = vshrl.u32 %v87, 7
    %v89 = vsub.s32 0, %v88
    %v90 = vrot.slane %v85, %v89
    %v108 = vunpack.c.l.b16 %v69
    %v109 = vunpack.c.l.b16 %v70
    %v110 = vunpack.c.l.b16 %v71
    %v111 = vunpack.c.l.b16 %v72
    %v112 = vunpack.c.l.b16 %v73
    %v113 = vunpack.c.l.b16 %v74
    %v114 = vunpack.c.l.b16 %v75
    %v115 = vunpack.c.l.b16 %v76
    %v116 = vunpack.c.l.b16 %v77
    %v117 = vunpack.c.l.b16 %v78
    %v118 = vunpack.c.l.b16 %v79
    %v119 = vunpack.c.l.b16 %v80
    %v120 = vunpack.c.l.b16 %v81
    %v121 = vunpack.c.l.b16 %v82
    %v122 = vunpack.c.l.b16 %v83
    %v123 = vunpack.c.l.b16 %v84
    %v124 = vpack.c.b16 %v109, %v108
    %v125 = vpack.c.b16 %v111, %v110
    %v126 = vpack.c.b16 %v113, %v112
    %v127 = vpack.c.b16 %v115, %v114
    %v128 = vpack.c.b16 %v117, %v116
    %v129 = vpack.c.b16 %v119, %v118
    %v130 = vpack.c.b16 %v121, %v120
    %v131 = vpack.c.b16 %v123, %v122
    %140 = vmatprep.subr.bf16.mxu0 0
    %141 = vmatpush1.bf16.msra.mxu0 %v124
    %142 = vmatprep.subr.bf16.mxu0 0
    %143 = vmatpush1.bf16.msra.mxu0 %v125
    %144 = vmatprep.subr.bf16.mxu0 0
    %145 = vmatpush1.bf16.msra.mxu0 %v126
    %146 = vmatprep.subr.bf16.mxu0 0
    %147 = vmatpush1.bf16.msra.mxu0 %v127
    %148 = vmatprep.subr.bf16.mxu0 0
    %149 = vmatpush1.bf16.msra.mxu0 %v128
    %150 = vmatprep.subr.bf16.mxu0 0
    %151 = vmatpush1.bf16.msra.mxu0 %v129
    %152 = vmatprep.subr.bf16.mxu0 0
    %153 = vmatpush1.bf16.msra.mxu0 %v130
    %154 = vmatprep.subr.bf16.mxu0 0
    %155 = vmatpush1.bf16.msra.mxu0 %v131
    %156 = vmatprep.subr.bf16.mxu0 0
    %157 = vmatpush1.bf16.msra.mxu0 0
    %158 = vmatprep.subr.bf16.mxu0 0
    %159 = vmatpush1.bf16.msra.mxu0 0
    %160 = vmatprep.subr.bf16.mxu0 0
    %161 = vmatpush1.bf16.msra.mxu0 0
    %162 = vmatprep.subr.bf16.mxu0 0
    %163 = vmatpush1.bf16.msra.mxu0 0
    %164 = vmatprep.subr.bf16.mxu0 0
    %165 = vmatpush1.bf16.msra.mxu0 0
    %166 = vmatprep.subr.bf16.mxu0 0
    %167 = vmatpush1.bf16.msra.mxu0 0
    %168 = vmatprep.subr.bf16.mxu0 0
    %169 = vmatpush1.bf16.msra.mxu0 0
    %170 = vmatprep.subr.bf16.mxu0 0
    %171 = vmatpush1.bf16.msra.mxu0 0
    %172 = vmatprep.mubr.bf16.mxu0 0
    %173 = vmatmul.mubr.bf16.gmra.mrb[0].mxu0 %v68
    %v174 = vpop.f32.mrb[0].mxu0
    %v175 = vadd.f32 %v90, %v174
    %v176 = vpop.f32.mrb[0].mxu0
    %v177 = vpop.f32.mrb[0].mxu0
    %v178 = vpop.f32.mrb[0].mxu0
    %179 = vdwg.mxu0
    %v180 = vmax.f32 %v175, 0.0
    %v181 = vpack.c.bf16 %v180, %v180
    %v182 = vld [vmem:[#allocation4] sm:$0xf]
    %v183 = vld [vmem:[#allocation4 + $0x4] sm:$0xf]
    %v184 = vld [vmem:[#allocation4 + $0x8] sm:$0xf]
    %v185 = vld [vmem:[#allocation4 + $0xc] sm:$0xf]
    %v186 = vld [vmem:[#allocation4 + $0x10] sm:$0xf]
    %v187 = vld [vmem:[#allocation4 + $0x14] sm:$0xf]
    %v188 = vld [vmem:[#allocation4 + $0x18] sm:$0xf]
    %v189 = vld [vmem:[#allocation4 + $0x1c] sm:$0xf]
    %v190 = vld [vmem:[#allocation4 + $0x20] sm:$0xf]
    %v191 = vld [vmem:[#allocation4 + $0x24] sm:$0xf]
    %v192 = vld [vmem:[#allocation4 + $0x28] sm:$0xf]
    %v193 = vld [vmem:[#allocation4 + $0x2c] sm:$0xf]
    %v194 = vld [vmem:[#allocation4 + $0x30] sm:$0xf]
    %v195 = vld [vmem:[#allocation4 + $0x34] sm:$0xf]
    %v196 = vld [vmem:[#allocation4 + $0x38] sm:$0xf]
    %v197 = vld [vmem:[#allocation4 + $0x3c] sm:$0xf]
    %v198 = vld [vmem:[%s4] sm:$0x1]
    %v200 = vlaneseq
    %v201 = vshrl.u32 %v200, 7
    %v202 = vsub.s32 0, %v201
    %v203 = vrot.slane %v198, %v202
    %v221 = vunpack.c.l.b16 %v182
    %v222 = vunpack.c.l.b16 %v183
    %v223 = vunpack.c.l.b16 %v184
    %v224 = vunpack.c.l.b16 %v185
    %v225 = vunpack.c.l.b16 %v186
    %v226 = vunpack.c.l.b16 %v187
    %v227 = vunpack.c.l.b16 %v188
    %v228 = vunpack.c.l.b16 %v189
    %v229 = vunpack.c.l.b16 %v190
    %v230 = vunpack.c.l.b16 %v191
    %v231 = vunpack.c.l.b16 %v192
    %v232 = vunpack.c.l.b16 %v193
    %v233 = vunpack.c.l.b16 %v194
    %v234 = vunpack.c.l.b16 %v195
    %v235 = vunpack.c.l.b16 %v196
    %v236 = vunpack.c.l.b16 %v197
    %v237 = vpack.c.b16 %v222, %v221
    %v238 = vpack.c.b16 %v224, %v223
    %v239 = vpack.c.b16 %v226, %v225
    %v240 = vpack.c.b16 %v228, %v227
    %v241 = vpack.c.b16 %v230, %v229
    %v242 = vpack.c.b16 %v232, %v231
    %v243 = vpack.c.b16 %v234, %v233
    %v244 = vpack.c.b16 %v236, %v235
    %253 = vmatprep.subr.bf16.mxu0 0
    %254 = vmatpush1.bf16.msra.mxu0 %v237
    %255 = vmatprep.subr.bf16.mxu0 0
    %256 = vmatpush1.bf16.msra.mxu0 %v238
    %257 = vmatprep.subr.bf16.mxu0 0
    %258 = vmatpush1.bf16.msra.mxu0 %v239
    %259 = vmatprep.subr.bf16.mxu0 0
    %260 = vmatpush1.bf16.msra.mxu0 %v240
    %261 = vmatprep.subr.bf16.mxu0 0
    %262 = vmatpush1.bf16.msra.mxu0 %v241
    %263 = vmatprep.subr.bf16.mxu0 0
    %264 = vmatpush1.bf16.msra.mxu0 %v242
    %265 = vmatprep.subr.bf16.mxu0 0
    %266 = vmatpush1.bf16.msra.mxu0 %v243
    %267 = vmatprep.subr.bf16.mxu0 0
    %268 = vmatpush1.bf16.msra.mxu0 %v244
    %269 = vmatprep.subr.bf16.mxu0 0
    %270 = vmatpush1.bf16.msra.mxu0 0
    %271 = vmatprep.subr.bf16.mxu0 0
    %272 = vmatpush1.bf16.msra.mxu0 0
    %273 = vmatprep.subr.bf16.mxu0 0
    %274 = vmatpush1.bf16.msra.mxu0 0
    %275 = vmatprep.subr.bf16.mxu0 0
    %276 = vmatpush1.bf16.msra.mxu0 0
    %277 = vmatprep.subr.bf16.mxu0 0
    %278 = vmatpush1.bf16.msra.mxu0 0
    %279 = vmatprep.subr.bf16.mxu0 0
    %280 = vmatpush1.bf16.msra.mxu0 0
    %281 = vmatprep.subr.bf16.mxu0 0
    %282 = vmatpush1.bf16.msra.mxu0 0
    %283 = vmatprep.subr.bf16.mxu0 0
    %284 = vmatpush1.bf16.msra.mxu0 0
    %285 = vmatprep.mubr.bf16.mxu0 0
    %286 = vmatmul.mubr.bf16.gmra.mrb[0].mxu0 %v181
    %v287 = vpop.f32.mrb[0].mxu0
    %v288 = vadd.f32 %v203, %v287
    %v289 = vpop.f32.mrb[0].mxu0
    %v290 = vpop.f32.mrb[0].mxu0
    %v291 = vpop.f32.mrb[0].mxu0
    %292 = vdwg.mxu0
    %v293 = vmax.f32 %v288, 0.0
    %v294 = vpack.c.bf16 %v293, %v293
    %v295 = vld [vmem:[#allocation6] sm:$0xf]
    %v296 = vld [vmem:[#allocation6 + $0x4] sm:$0xf]
    %v297 = vld [vmem:[#allocation6 + $0x8] sm:$0xf]
    %v298 = vld [vmem:[#allocation6 + $0xc] sm:$0xf]
    %v299 = vld [vmem:[#allocation6 + $0x10] sm:$0xf]
    %v300 = vld [vmem:[#allocation6 + $0x14] sm:$0xf]
    %v301 = vld [vmem:[#allocation6 + $0x18] sm:$0xf]
    %v302 = vld [vmem:[#allocation6 + $0x1c] sm:$0xf]
    %v303 = vld [vmem:[#allocation6 + $0x20] sm:$0xf]
    %v304 = vld [vmem:[#allocation6 + $0x24] sm:$0xf]
    %v305 = vld [vmem:[#allocation6 + $0x28] sm:$0xf]
    %v306 = vld [vmem:[#allocation6 + $0x2c] sm:$0xf]
    %v307 = vld [vmem:[#allocation6 + $0x30] sm:$0xf]
    %v308 = vld [vmem:[#allocation6 + $0x34] sm:$0xf]
    %v309 = vld [vmem:[#allocation6 + $0x38] sm:$0xf]
    %v310 = vld [vmem:[#allocation6 + $0x3c] sm:$0xf]
    %v311 = vld [vmem:[%s6] sm:$0x1]
    %v313 = vlaneseq
    %v314 = vshrl.u32 %v313, 7
    %v315 = vsub.s32 0, %v314
    %v316 = vrot.slane %v311, %v315
    %v334 = vunpack.c.l.b16 %v295
    %v335 = vunpack.c.l.b16 %v296
    %v336 = vunpack.c.l.b16 %v297
    %v337 = vunpack.c.l.b16 %v298
    %v338 = vunpack.c.l.b16 %v299
    %v339 = vunpack.c.l.b16 %v300
    %v340 = vunpack.c.l.b16 %v301
    %v341 = vunpack.c.l.b16 %v302
    %v342 = vunpack.c.l.b16 %v303
    %v343 = vunpack.c.l.b16 %v304
    %v344 = vunpack.c.l.b16 %v305
    %v345 = vunpack.c.l.b16 %v306
    %v346 = vunpack.c.l.b16 %v307
    %v347 = vunpack.c.l.b16 %v308
    %v348 = vunpack.c.l.b16 %v309
    %v349 = vunpack.c.l.b16 %v310
    %v350 = vpack.c.b16 %v335, %v334
    %v351 = vpack.c.b16 %v337, %v336
    %v352 = vpack.c.b16 %v339, %v338
    %v353 = vpack.c.b16 %v341, %v340
    %v354 = vpack.c.b16 %v343, %v342
    %v355 = vpack.c.b16 %v345, %v344
    %v356 = vpack.c.b16 %v347, %v346
    %v357 = vpack.c.b16 %v349, %v348
    %366 = vmatprep.subr.bf16.mxu0 0
    %367 = vmatpush1.bf16.msra.mxu0 %v350
    %368 = vmatprep.subr.bf16.mxu0 0
    %369 = vmatpush1.bf16.msra.mxu0 %v351
    %370 = vmatprep.subr.bf16.mxu0 0
    %371 = vmatpush1.bf16.msra.mxu0 %v352
    %372 = vmatprep.subr.bf16.mxu0 0
    %373 = vmatpush1.bf16.msra.mxu0 %v353
    %374 = vmatprep.subr.bf16.mxu0 0
    %375 = vmatpush1.bf16.msra.mxu0 %v354
    %376 = vmatprep.subr.bf16.mxu0 0
    %377 = vmatpush1.bf16.msra.mxu0 %v355
    %378 = vmatprep.subr.bf16.mxu0 0
    %379 = vmatpush1.bf16.msra.mxu0 %v356
    %380 = vmatprep.subr.bf16.mxu0 0
    %381 = vmatpush1.bf16.msra.mxu0 %v357
    %382 = vmatprep.subr.bf16.mxu0 0
    %383 = vmatpush1.bf16.msra.mxu0 0
    %384 = vmatprep.subr.bf16.mxu0 0
    %385 = vmatpush1.bf16.msra.mxu0 0
    %386 = vmatprep.subr.bf16.mxu0 0
    %387 = vmatpush1.bf16.msra.mxu0 0
    %388 = vmatprep.subr.bf16.mxu0 0
    %389 = vmatpush1.bf16.msra.mxu0 0
    %390 = vmatprep.subr.bf16.mxu0 0
    %391 = vmatpush1.bf16.msra.mxu0 0
    %392 = vmatprep.subr.bf16.mxu0 0
    %393 = vmatpush1.bf16.msra.mxu0 0
    %394 = vmatprep.subr.bf16.mxu0 0
    %395 = vmatpush1.bf16.msra.mxu0 0
    %396 = vmatprep.subr.bf16.mxu0 0
    %397 = vmatpush1.bf16.msra.mxu0 0
    %398 = vmatprep.mubr.bf16.mxu0 0
    %399 = vmatmul.mubr.bf16.gmra.mrb[0].mxu0 %v294
    %v400 = vpop.f32.mrb[0].mxu0
    %v401 = vadd.f32 %v316, %v400
    %v402 = vpop.f32.mrb[0].mxu0
    %v403 = vpop.f32.mrb[0].mxu0
    %v404 = vpop.f32.mrb[0].mxu0
    %405 = vdwg.mxu0
    %v406 = vlaneseq
    %v407 = vand.u32 %v406, 127
    %vm408 = vcmp.lt.s32.totalorder %v407, 10
    %v409 = vsel %vm408, %v401, -1e+30
    %410 = vmax.xlane.f32.xlu0 %v409
    %v411 = vpop.xlane.xlu0 %410
    %v412 = vsub.f32 %v409, %v411
    %v413 = vmul.f32 %v412, 1.442695
    %v414 = vpow.pop %v413
    %415 = vadd.xlane.f32.xlu0 %v414
    %v416 = vpop.xlane.xlu0 %415
    %v417 = vlog2.pop %v416
    %v418 = vmul.f32 %v417, 0.6931472
    %v419 = vsub.f32 %v412, %v418
    %420 = vst [vmem:[%s7] sm:$0xff] %v419
    // Predicated region
    $region42: #{fused_mlp_forward.1} parent=1 // pred_check
      _
    $region43: #{fused_mlp_forward.1} parent=1 // pred_check_branch
      %422 = sbr.rel (0) target = $region45
    $region44: #{fused_mlp_forward.1} parent=1 // pred_region
      _
    $region45: #{fused_mlp_forward.1} parent=1 // pred_fallthru
      _
    // Predicated region
    $region46: #{fused_mlp_forward.1} parent=1 // pred_check
      _
    $region47: #{fused_mlp_forward.1} parent=1 // pred_check_branch
      %424 = sbr.rel (0) target = $region49
    $region48: #{fused_mlp_forward.1} parent=1 // pred_region
      _
    $region49: #{fused_mlp_forward.1} parent=1 // pred_fallthru
      _
    %425 = vsyncpa [#allocation3], 1
    %426 = vsyncpa [#allocation5], 1

</llo_original>
